<compile_context>
chip_gen: v7x
topology: tpu7x:2x2x1
jax: 0.10.0
libtpu: 0.0.40
codegen_flags: <defaults>
</compile_context>

<pallas_src>
import math
import functools

import jax
import jax.numpy as jnp
from jax.experimental import pallas as pl
from jax.experimental.pallas import tpu as pltpu


def _embed_kernel(x_ref, w_ref, o_ref, xcat_ref, *, c_in, seq_len):
    # x_ref:    (1, L, c_in)          one full batch row (circular wrap stays in-tile)
    # w_ref:    (3*c_in + 1, TILE_N)  rows = [W_prev; W_mid; W_next; bias]
    # o_ref:    (1, L, TILE_N)
    # xcat_ref: (L, 3*c_in + 1)       per-batch scratch: [x_prev | x_mid | x_next | 1]

    # Build the fused-tap matrix once per batch row (j == 0) and reuse it for
    # every d_model tile (j axis is "arbitrary", so this ordering is preserved).
    @pl.when(pl.program_id(1) == 0)
    def _():
        x_mid = x_ref[0]                                       # (L, c_in)
        x_prev = pltpu.roll(x_mid, shift=1, axis=0)            # x[(t-1) % L]
        x_next = pltpu.roll(x_mid, shift=seq_len - 1, axis=0)  # x[(t+1) % L]
        ones = jnp.ones((seq_len, 1), dtype=x_mid.dtype)
        xcat_ref[...] = jnp.concatenate([x_prev, x_mid, x_next, ones], axis=-1)

    # One fused matmul: K = 3*c_in + 1 (bias folded in), f32 accumulation.
    acc = jnp.dot(xcat_ref[...], w_ref[...], preferred_element_type=jnp.float32)
    o_ref[0] = acc.astype(o_ref.dtype)


def my_embedding(x, weight, bias, *, vmem_out_budget_bytes=12 * 1024 * 1024):
    """Circular Conv1d(k=3, pad=1) token embedding.

    x:      (B, L, c_in)        channels-last, as the PyTorch forward receives it
    weight: (d_model, c_in, 3)  PyTorch Conv1d weight layout
    bias:   (d_model,)
    returns (B, L, d_model)
    """
    B, L, c_in = x.shape
    d_model = weight.shape[0]
    K = 3 * c_in + 1
    itemsize = x.dtype.itemsize

    # Conv weight (d_model, c_in, 3) -> stacked matmul weight (3*c_in, d_model);
    # tap k multiplies x[b, t + k - 1, :].  Bias folded in as the last K row,
    # matched by a ones column in x_cat.
    w_mat = jnp.concatenate(
        [weight[:, :, 0], weight[:, :, 1], weight[:, :, 2]], axis=1).T    # (3*c_in, d_model)
    w_mat = jnp.concatenate([w_mat, bias.reshape(1, d_model)], axis=0)    # (K, d_model)
    w_mat = w_mat.astype(x.dtype)

    # Largest lane-dense tile whose double-buffered output block fits the budget.
    max_tile_by_budget = max(
        128, (vmem_out_budget_bytes // (2 * L * itemsize)) // 128 * 128)

    if d_model % 128 == 0:
        # Largest 128-multiple divisor of d_model within budget: full unmasked
        # vst bursts, no padding, no post-call slice.
        tile_n = 128
        for cand in range(d_model, 127, -128):
            if d_model % cand == 0 and cand <= max_tile_by_budget:
                tile_n = cand
                break
        n_tiles = d_model // tile_n
    elif d_model < 128 or d_model <= max_tile_by_budget:
        # Single full-width tile (block dim == full array dim): lane-masked
        # stores on the last partial lane group, but no padded output / slice.
        tile_n, n_tiles = d_model, 1
    else:
        # d_model > 128, not a 128-multiple: cdiv tiles; pad the (tiny) weight
        # columns so weight blocks stay in bounds; Pallas masks the overhanging
        # output columns of the last tile -> still no post-call slice.
        tile_n = min(max_tile_by_budget, ((d_model + 127) // 128) * 128)
        n_tiles = -(-d_model // tile_n)
        w_mat = jnp.pad(w_mat, ((0, 0), (0, n_tiles * tile_n - d_model)))

    # Scoped-VMEM sizing: double-buffered x / out / weight blocks + the x_cat
    # scratch, with 2x headroom, clamped to v7x's 64 MiB physical VMEM per TC.
    ru = lambda v, m: ((v + m - 1) // m) * m
    est = (2 * L * ru(c_in, 128) * itemsize            # x block (double-buffered)
           + 2 * L * ru(tile_n, 128) * itemsize        # out block (double-buffered)
           + 2 * ru(K, 8) * ru(tile_n, 128) * itemsize  # weight block
           + L * ru(K, 128) * itemsize)                # x_cat scratch
    vmem_limit = int(min(64 * 2 ** 20, max(16 * 2 ** 20, 2 * est)))

    kernel = functools.partial(_embed_kernel, c_in=c_in, seq_len=L)

    return pl.pallas_call(
        kernel,
        out_shape=jax.ShapeDtypeStruct((B, L, d_model), x.dtype),
        grid=(B, n_tiles),
        in_specs=[
            # One full batch row per step (same block for all j -> fetched once per b).
            pl.BlockSpec((1, L, c_in), lambda b, j: (b, 0, 0)),
            # Loop-invariant fused weight+bias, tiled only along N (VMEM-resident).
            pl.BlockSpec((K, tile_n), lambda b, j: (0, j)),
        ],
        out_specs=pl.BlockSpec((1, L, tile_n), lambda b, j: (b, 0, j)),
        scratch_shapes=[pltpu.VMEM((L, K), x.dtype)],
        compiler_params=pltpu.CompilerParams(
            # j must be "arbitrary": x_cat is filled at j == 0 and reused by the
            # remaining d_model tiles of the same batch row.
            dimension_semantics=("parallel", "arbitrary"),
            vmem_limit_bytes=vmem_limit),
    )(x, w_mat)


def _reference(x, weight, bias):
    # Pure-JAX reference of the circular Conv1d (for correctness check).
    x_prev = jnp.roll(x, 1, axis=1)
    x_next = jnp.roll(x, -1, axis=1)
    return (jnp.einsum('blc,oc->blo', x_prev, weight[:, :, 0])
            + jnp.einsum('blc,oc->blo', x, weight[:, :, 1])
            + jnp.einsum('blc,oc->blo', x_next, weight[:, :, 2])
            + bias[None, None, :])


if __name__ == "__main__":
    key = jax.random.PRNGKey(0)

    def init_params(k, c_in, d_model):
        k_w, k_b = jax.random.split(k)
        fan_in = c_in * 3
        gain = math.sqrt(2.0 / (1.0 + 0.01 ** 2))   # kaiming_normal_, leaky_relu a=0.01
        std = gain / math.sqrt(fan_in)
        weight = std * jax.random.normal(k_w, (d_model, c_in, 3), dtype=jnp.float32)
        bound = 1.0 / math.sqrt(fan_in)             # default Conv1d bias init
        bias = jax.random.uniform(k_b, (d_model,), minval=-bound, maxval=bound,
                                  dtype=jnp.float32)
        return weight, bias

    # Primary check: small shapes implied by the module (single N tile).
    B, L, c_in, d_model = 2, 8, 4, 32
    k_x, k_p, k_x2, k_p2 = jax.random.split(key, 4)
    x = jax.random.normal(k_x, (B, L, c_in), dtype=jnp.float32)
    weight, bias = init_params(k_p, c_in, d_model)

    out = jax.block_until_ready(my_embedding(x, weight, bias))
    ref = _reference(x, weight, bias)
    assert out.shape == (B, L, d_model)
    assert jnp.allclose(out, ref, atol=1e-4, rtol=1e-4)

    # Secondary check: multi-tile d_model path (forces tile_n=128 -> 2 N tiles)
    # exercising the per-batch x_cat scratch reuse across j.
    d_model2 = 256
    x2 = jax.random.normal(k_x2, (B, L, c_in), dtype=jnp.float32)
    weight2, bias2 = init_params(k_p2, c_in, d_model2)
    out2 = jax.block_until_ready(
        my_embedding(x2, weight2, bias2, vmem_out_budget_bytes=2 * L * 128 * 4))
    ref2 = _reference(x2, weight2, bias2)
    assert out2.shape == (B, L, d_model2)
    assert jnp.allclose(out2, ref2, atol=1e-4, rtol=1e-4)

    print("KERNEL_OK")
</pallas_src>

<mosaic_0001>
module attributes {stable_mosaic.version = 11 : i64} {
  func.func @_embed_kernel(%arg0: i32, %arg1: i32, %arg2: memref<1x8x4xf32, #tpu.memory_space<vmem>>, %arg3: memref<13x32xf32, #tpu.memory_space<vmem>>, %arg4: memref<1x8x32xf32, #tpu.memory_space<vmem>>, %arg5: memref<8x13xf32, #tpu.memory_space<vmem>>) attributes {dimension_semantics = [#tpu.dimension_semantics<parallel>, #tpu.dimension_semantics<arbitrary>], iteration_bounds = array<i64: 2, 1>, scalar_prefetch = 0 : i64, scratch_operands = 1 : i64, tpu.core_type = #tpu.core_type<tc>, window_params = [{transform_indices = @transform_0, window_bounds = array<i64: 1, 8, 4>}, {transform_indices = @transform_1, window_bounds = array<i64: 13, 32>}, {transform_indices = @transform_2, window_bounds = array<i64: 1, 8, 32>}]} {
    %c0_i32 = arith.constant 0 : i32
    %0 = arith.cmpi eq, %arg1, %c0_i32 : i32
    %1 = arith.extui %0 : i1 to i32
    %c0_i32_0 = arith.constant 0 : i32
    %2 = arith.cmpi ne, %1, %c0_i32_0 : i32
    scf.if %2 {
      %c0_7 = arith.constant 0 : index
      %c0_8 = arith.constant 0 : index
      %c0_9 = arith.constant 0 : index
      %9 = vector.load %arg2[%c0_7, %c0_8, %c0_9] : memref<1x8x4xf32, #tpu.memory_space<vmem>>, vector<1x8x4xf32>
      %10 = vector.shape_cast %9 : vector<1x8x4xf32> to vector<8x4xf32>
      %c1_i32 = arith.constant 1 : i32
      %11 = tpu.dynamic_rotate %10 by %c1_i32 dim 0 : vector<8x4xf32>, i32 -> vector<8x4xf32>
      %c7_i32 = arith.constant 7 : i32
      %12 = tpu.dynamic_rotate %10 by %c7_i32 dim 0 : vector<8x4xf32>, i32 -> vector<8x4xf32>
      %cst_10 = arith.constant 1.000000e+00 : f32
      %13 = vector.broadcast %cst_10 : f32 to vector<8x1xf32>
      %14 = tpu.concatenate %11, %10, %12, %13 in 1 : vector<8x4xf32>, vector<8x4xf32>, vector<8x4xf32>, vector<8x1xf32> -> vector<8x13xf32>
      %c0_11 = arith.constant 0 : index
      %c0_12 = arith.constant 0 : index
      %15 = vector.load %arg5[%c0_11, %c0_12] : memref<8x13xf32, #tpu.memory_space<vmem>>, vector<8x13xf32>
      tpu.vector_store %arg5[%c0_11, %c0_12], %14 {strides = array<i32>} : memref<8x13xf32, #tpu.memory_space<vmem>>, vector<8x13xf32>,
    } else {
    }
    %c0 = arith.constant 0 : index
    %c0_1 = arith.constant 0 : index
    %3 = vector.load %arg5[%c0, %c0_1] : memref<8x13xf32, #tpu.memory_space<vmem>>, vector<8x13xf32>
    %c0_2 = arith.constant 0 : index
    %c0_3 = arith.constant 0 : index
    %4 = vector.load %arg3[%c0_2, %c0_3] : memref<13x32xf32, #tpu.memory_space<vmem>>, vector<13x32xf32>
    %cst = arith.constant dense<0.000000e+00> : vector<8x32xf32>
    %5 = tpu.matmul %3, %4, %cst {dimension_numbers = #tpu.dot_dimension_numbers<[1], [0], [0], [1], [0, 0, 1, 1], [], []>} : vector<8x13xf32>, vector<13x32xf32>, vector<8x32xf32> -> vector<8x32xf32>
    %c0_4 = arith.constant 0 : index
    %c0_5 = arith.constant 0 : index
    %c0_6 = arith.constant 0 : index
    %6 = vector.load %arg4[%c0_4, %c0_5, %c0_6] : memref<1x8x32xf32, #tpu.memory_space<vmem>>, vector<1x8x32xf32>
    %7 = vector.shape_cast %6 : vector<1x8x32xf32> to vector<8x32xf32>
    %8 = vector.shape_cast %5 : vector<8x32xf32> to vector<1x8x32xf32>
    tpu.vector_store %arg4[%c0_4, %c0_5, %c0_6], %8 {strides = array<i32>} : memref<1x8x32xf32, #tpu.memory_space<vmem>>, vector<1x8x32xf32>,
    return
  }
  func.func @transform_0(%arg0: i32, %arg1: i32) -> (i32, i32, i32) {
    %c0_i32 = arith.constant 0 : i32
    %c0_i32_0 = arith.constant 0 : i32
    %c0_i32_1 = arith.constant 0 : i32
    return %arg0, %c0_i32, %c0_i32_0 : i32, i32, i32
  }
  func.func @transform_1(%arg0: i32, %arg1: i32) -> (i32, i32) {
    %c0_i32 = arith.constant 0 : i32
    %c0_i32_0 = arith.constant 0 : i32
    return %c0_i32, %arg1 : i32, i32
  }
  func.func @transform_2(%arg0: i32, %arg1: i32) -> (i32, i32, i32) {
    %c0_i32 = arith.constant 0 : i32
    %c0_i32_0 = arith.constant 0 : i32
    return %arg0, %c0_i32, %arg1 : i32, i32, i32
  }
}

</mosaic_0001>

<llo_original>
// kernel: tpu_custom_call.1
$region0: #{tpu_custom_call.1}
  #allocation0 [shape = 'u32[]', space=smem, size = 0x4, offset = 0x4, fixed_abs, tag = 'smem constant byte address 0x4 - core index']
  #allocation1 [shape = 'u32[144,128]{1,0:T(1,128)}', space=vmem, size = 0x12000, scoped, tag = 'internal scratch']
  #allocation2 [shape = 'f32[8,13]{1,0:T(8,128)}', space=vmem, size = 0x1000, scoped, tag = 'scratch operand']
  %s0 = inlined_call_operand.vmem [shape: f32[2,8,4], index: 0, kind: input, shape index: {}]
  %s1 = inlined_call_operand.vmem [shape: f32[13,32], index: 1, kind: input, shape index: {}]
  %s2 = inlined_call_operand.hbm [shape: f32[2,8,32], index: 2, kind: output, shape index: {}]
  %s3 = sld [smem:[#allocation0]]
  $region45: #{tpu_custom_call.1} parent=0
    _
  %s5 = ssub.s32 1, %s3
  %s6 = scalar_select 0, %s5, %s3
  $region1: #{tpu_custom_call.1} parent=0
    #allocation3 [shape = 'u8[8192]{0}', space=vmem, size = 0x2000, scoped, tag = 'output window, operand 0']
    #allocation4 [shape = 's32[2]{0}', space=sflag, size = 0x8, scoped, tag = 'scoped memory for tpu_custom_call.1']
    %7 = vsyncpa [#allocation4], 0
    %s8 = scalar_lea.sflag [#allocation4], 1
    %9 = vsyncpa %s8, 0
    loop: start=0, step=1, limit=4
    $region2: #{tpu_custom_call.1} parent=1 // loop_pre_header
      _
    $region3: #{tpu_custom_call.1} parent=1 // loop_header
      %s11 = sphi 0, %s15
      %p12 = scmp.ge.s32.totalorder %s11, 4
      %s18 = sphi 0, %s30
      %s19 = sphi 0, %s26
      %s20 = sphi 0, %s18
      %s21 = sphi 0, %s19
      %s22 = sphi 0, %s20
      %s23 = sphi 0, %s21
      %s33 = sphi 0, %s35
      %s36 = sphi 0, %s33
      %s37 = sphi 0, %s36
      %s53 = sphi 0, %s37
      %s59 = sphi 0, %s61
      %s62 = sphi 0, %s59
      %s63 = sphi 0, %s62
      %s79 = sphi 0, %s63
      %s87 = sphi 0, %s89
      %s90 = sphi 0, %s87
      %s91 = sphi 0, %s90
      %s107 = sphi 0, %s91
    $region4: #{tpu_custom_call.1} parent=1 // loop_header_branch
      %14 = sbr.rel (%p12) target = $region8
    $region5: #{tpu_custom_call.1} parent=1 // loop_body
      %s16 = ssub.s32 %s11, 1
      %s17 = ssub.s32 %s11, 2
      %s24 = sadd.s32 1, %s19
      %p25 = scmp.ge.s32.totalorder %s24, 1
      %s26 = scalar_select %p25, 0, %s24
      %s27 = sadd.s32 1, %s18
      %s28 = scalar_select %p25, %s27, %s18
      %p29 = scmp.ge.s32.totalorder %s28, 2
      %s30 = scalar_select %p29, 0, %s28
      %s31 = ssub.s32 %s18, %s30
      %p32 = scmp.eq.s32.totalorder %s31, 0
      %s34 = sadd.s32 %s33, 1
      %s35 = scalar_select %p32, %s33, %s34
      %p38 = pneg %p32
      %p39 = scmp.eq.s32.totalorder %s11, 1
      %p40 = por %p38, %p39
      %p41 = scmp.ne.s32.totalorder %s33, %s36
      %p42 = scmp.eq.s32.totalorder %s11, 0
      %p43 = por %p41, %p42
      %p44 = scmp.ne.s32.totalorder %s33, %s36
      %p45 = scmp.eq.s32.totalorder %s16, 1
      %p46 = por %p44, %p45
      %p47 = scmp.ne.s32.totalorder %s36, %s37
      %p48 = scmp.eq.s32.totalorder %s16, 0
      %p49 = por %p47, %p48
      %p50 = scmp.ne.s32.totalorder %s36, %s37
      %p51 = scmp.eq.s32.totalorder %s17, 1
      %p52 = por %p50, %p51
      %p54 = scmp.ne.s32.totalorder %s37, %s53
      %p55 = scmp.eq.s32.totalorder %s17, 0
      %p56 = por %p54, %p55
      %s57 = ssub.s32 %s19, %s26
      %p58 = scmp.eq.s32.totalorder %s57, 0
      %s60 = sadd.s32 %s59, 1
      %s61 = scalar_select %p58, %s59, %s60
      %p64 = pneg %p58
      %p65 = scmp.eq.s32.totalorder %s11, 1
      %p66 = por %p64, %p65
      %p67 = scmp.ne.s32.totalorder %s59, %s62
      %p68 = scmp.eq.s32.totalorder %s11, 0
      %p69 = por %p67, %p68
      %p70 = scmp.ne.s32.totalorder %s59, %s62
      %p71 = scmp.eq.s32.totalorder %s16, 1
      %p72 = por %p70, %p71
      %p73 = scmp.ne.s32.totalorder %s62, %s63
      %p74 = scmp.eq.s32.totalorder %s16, 0
      %p75 = por %p73, %p74
      %p76 = scmp.ne.s32.totalorder %s62, %s63
      %p77 = scmp.eq.s32.totalorder %s17, 1
      %p78 = por %p76, %p77
      %p80 = scmp.ne.s32.totalorder %s63, %s79
      %p81 = scmp.eq.s32.totalorder %s17, 0
      %p82 = por %p80, %p81
      %s83 = ssub.s32 %s18, %s30
      %s84 = ssub.s32 %s19, %s26
      %s85 = sor.u32 %s83, %s84
      %p86 = scmp.eq.s32.totalorder %s85, 0
      %s88 = sadd.s32 %s87, 1
      %s89 = scalar_select %p86, %s87, %s88
      %p92 = pneg %p86
      %p93 = scmp.eq.s32.totalorder %s11, 1
      %p94 = por %p92, %p93
      %p95 = scmp.ne.s32.totalorder %s87, %s90
      %p96 = scmp.eq.s32.totalorder %s11, 0
      %p97 = por %p95, %p96
      %p98 = scmp.ne.s32.totalorder %s87, %s90
      %p99 = scmp.eq.s32.totalorder %s16, 1
      %p100 = por %p98, %p99
      %p101 = scmp.ne.s32.totalorder %s90, %s91
      %p102 = scmp.eq.s32.totalorder %s16, 0
      %p103 = por %p101, %p102
      %p104 = scmp.ne.s32.totalorder %s90, %s91
      %p105 = scmp.eq.s32.totalorder %s17, 1
      %p106 = por %p104, %p105
      %p108 = scmp.ne.s32.totalorder %s91, %s107
      %p109 = scmp.eq.s32.totalorder %s17, 0
      %p110 = por %p108, %p109
      %p111 = scmp.le.s32.totalorder 1, %s11
      %p112 = scmp.lt.s32.totalorder %s11, 3
      %p113 = pnand %p111, %p112
      %p114 = pneg %p113
      // Predicated region
      $region9: #{tpu_custom_call.1} parent=5 // pred_check
        _
      $region10: #{tpu_custom_call.1} parent=5 // pred_check_branch
        %116 = sbr.rel (%p113) target = $region12
      $region11: #{tpu_custom_call.1} parent=5 // pred_region
        %s117 = ssub.s32 %s11, 1
        // Predicated region
        $region13: #{tpu_custom_call.1} parent=11 // pred_check
          %p118 = pneg %p75
        $region14: #{tpu_custom_call.1} parent=11 // pred_check_branch
          %120 = sbr.rel (%p118) target = $region16
        $region15: #{tpu_custom_call.1} parent=11 // pred_region
          %p121 = scmp.lt.s32.totalorder %s21, 0
          %s122 = scalar_select %p121, %s21, 0
          %s123 = smul.addr %s122, 8
          %s124 = scalar_lea.vmem %s1, %s123
        $region16: #{tpu_custom_call.1} parent=11 // pred_fallthru
          _
      $region12: #{tpu_custom_call.1} parent=5 // pred_fallthru
        _
      %p125 = scmp.lt.s32.totalorder %s11, 2
      // Predicated region
      $region17: #{tpu_custom_call.1} parent=5 // pred_check
        %p126 = pneg %p125
      $region18: #{tpu_custom_call.1} parent=5 // pred_check_branch
        %128 = sbr.rel (%p126) target = $region20
      $region19: #{tpu_custom_call.1} parent=5 // pred_region
        // Predicated region
        $region21: #{tpu_custom_call.1} parent=19 // pred_check
          %p129 = pneg %p43
        $region22: #{tpu_custom_call.1} parent=19 // pred_check_branch
          %131 = sbr.rel (%p129) target = $region24
        $region23: #{tpu_custom_call.1} parent=19 // pred_region
          %p132 = scmp.lt.s32.totalorder %s18, 1
          %s133 = scalar_select %p132, %s18, 1
          %s134 = smul.addr %s133, 8
          %s135 = scalar_lea.vmem %s0, %s134
        $region24: #{tpu_custom_call.1} parent=19 // pred_fallthru
          _
      $region20: #{tpu_custom_call.1} parent=5 // pred_fallthru
        _
      %p136 = scmp.le.s32.totalorder 1, %s11
      %p137 = scmp.lt.s32.totalorder %s11, 3
      %p138 = pnand %p136, %p137
      %p139 = pneg %p138
      // Predicated region
      $region25: #{tpu_custom_call.1} parent=5 // pred_check
        _
      $region26: #{tpu_custom_call.1} parent=5 // pred_check_branch
        %141 = sbr.rel (%p138) target = $region28
      $region27: #{tpu_custom_call.1} parent=5 // pred_region
        %s142 = ssub.s32 %s11, 1
        %p143 = scmp.lt.s32.totalorder %s20, 1
        %s144 = scalar_select %p143, %s20, 1
        %s145 = smul.addr %s144, 8
        %s146 = scalar_lea.vmem %s0, %s145
        %p147 = pneg %p49
        %p148 = pneg %p46
        %p149 = scmp.lt.s32.totalorder %s21, 0
        %s150 = scalar_select %p149, %s21, 0
        %s151 = smul.addr %s150, 8
        %s152 = scalar_lea.vmem %s1, %s151
        %p153 = pneg %p75
        %p154 = pneg %p72
        %p155 = pneg %p103
        %p156 = pneg %p100
        %s157 = sand.u32 %s90, 1
        %s158 = scalar_lea.sflag [#allocation4], %s157
        %s159 = sand.u32 %s90, 1
        %s160 = smul.addr %s159, 8
        %s161 = scalar_lea.vmem [#allocation3], %s160
        %p162 = scmp.lt.s32.totalorder %s20, 1
        %s163 = scalar_select %p162, %s20, 1
        %s164 = smul.addr %s163, 8
        %s165 = scalar_lea.vmem %s0, %s164
        %p166 = scmp.lt.s32.totalorder %s21, 0
        %s167 = scalar_select %p166, %s21, 0
        %s168 = smul.addr %s167, 8
        %s169 = scalar_lea.vmem %s1, %s168
        %p170 = scmp.eq.s32.totalorder %s21, 0
        // Predicated region
        $region29: #{tpu_custom_call.1} parent=27 // pred_check
          %p171 = pneg %p170
        $region30: #{tpu_custom_call.1} parent=27 // pred_check_branch
          %173 = sbr.rel (%p171) target = $region32
        $region31: #{tpu_custom_call.1} parent=27 // pred_region
          %v174 = vld [vmem:[%s165] sm:$0xff]
          %v175 = vrot.slane %v174, 7
          %v176 = vrot.slane %v174, 1
          %178 = vrot.lane.b32.xlu0 %v174, 4
          %v179 = vpop.permute.xlu0 %178
          %182 = vrot.lane.b32.xlu0 %v176, 8
          %v183 = vpop.permute.xlu0 %182
          %vm185 = vcmask 31744
          %v186 = vsel %vm185, %v175, %v179
          %vm187 = vcmask 64512
          %v188 = vsel %vm187, %v186, %v183
          %vm189 = vcmask 97280
          %v190 = vsel %vm189, %v188, 1.0
          %vm191 = vcmask 105472
          %192 = vst.msk [vmem:[#allocation2] sm:$0xff] %vm191, %v190
        $region32: #{tpu_custom_call.1} parent=27 // pred_fallthru
          _
        %v193 = vld [vmem:[#allocation2] sm:$0xff]
        %v194 = vld [vmem:[%s169] sm:$0xff]
        %v195 = vld [vmem:[%s169 + $0x8] sm:$0x1f]
        %vm196 = vcmask 105472
        %v198 = vsel %vm196, %v193, 0
        %vm200 = vcmask 1044480
        %v202 = vsel %vm200, %v195, 0
        %204 = vmatprep.subr.mxu0 0.0
        %205 = vmatpush1.msra.mxu0 %v194
        %206 = vmatprep.subr.mxu0 0.0
        %207 = vmatpush1.msra.mxu0 %v202
        %208 = vmatprep.subr.mxu0 0.0
        %209 = vmatpush1.msra.mxu0 0.0
        %210 = vmatprep.subr.mxu0 0.0
        %211 = vmatpush1.msra.mxu0 0.0
        %212 = vmatprep.subr.mxu0 0.0
        %213 = vmatpush1.msra.mxu0 0.0
        %214 = vmatprep.subr.mxu0 0.0
        %215 = vmatpush1.msra.mxu0 0.0
        %216 = vmatprep.subr.mxu0 0.0
        %217 = vmatpush1.msra.mxu0 0.0
        %218 = vmatprep.subr.mxu0 0.0
        %219 = vmatpush1.msra.mxu0 0.0
        %220 = vmatprep.subr.mxu0 0.0
        %221 = vmatpush1.msra.mxu0 0.0
        %222 = vmatprep.subr.mxu0 0.0
        %223 = vmatpush1.msra.mxu0 0.0
        %224 = vmatprep.subr.mxu0 0.0
        %225 = vmatpush1.msra.mxu0 0.0
        %226 = vmatprep.subr.mxu0 0.0
        %227 = vmatpush1.msra.mxu0 0.0
        %228 = vmatprep.subr.mxu0 0.0
        %229 = vmatpush1.msra.mxu0 0.0
        %230 = vmatprep.subr.mxu0 0.0
        %231 = vmatpush1.msra.mxu0 0.0
        %232 = vmatprep.subr.mxu0 0.0
        %233 = vmatpush1.msra.mxu0 0.0
        %234 = vmatprep.subr.mxu0 0.0
        %235 = vmatpush1.msra.mxu0 0.0
        %236 = vmatprep.subr.mxu0 0.0
        %237 = vmatpush1.msra.mxu0 0.0
        %238 = vmatprep.subr.mxu0 0.0
        %239 = vmatpush1.msra.mxu0 0.0
        %240 = vmatprep.subr.mxu0 0.0
        %241 = vmatpush1.msra.mxu0 0.0
        %242 = vmatprep.subr.mxu0 0.0
        %243 = vmatpush1.msra.mxu0 0.0
        %244 = vmatprep.subr.mxu0 0.0
        %245 = vmatpush1.msra.mxu0 0.0
        %246 = vmatprep.subr.mxu0 0.0
        %247 = vmatpush1.msra.mxu0 0.0
        %248 = vmatprep.subr.mxu0 0.0
        %249 = vmatpush1.msra.mxu0 0.0
        %250 = vmatprep.subr.mxu0 0.0
        %251 = vmatpush1.msra.mxu0 0.0
        %252 = vmatprep.subr.mxu0 0.0
        %253 = vmatpush1.msra.mxu0 0.0
        %254 = vmatprep.subr.mxu0 0.0
        %255 = vmatpush1.msra.mxu0 0.0
        %256 = vmatprep.subr.mxu0 0.0
        %257 = vmatpush1.msra.mxu0 0.0
        %258 = vmatprep.subr.mxu0 0.0
        %259 = vmatpush1.msra.mxu0 0.0
        %260 = vmatprep.subr.mxu0 0.0
        %261 = vmatpush1.msra.mxu0 0.0
        %262 = vmatprep.subr.mxu0 0.0
        %263 = vmatpush1.msra.mxu0 0.0
        %264 = vmatprep.subr.mxu0 0.0
        %265 = vmatpush1.msra.mxu0 0.0
        %266 = vmatprep.subr.mxu0 0.0
        %267 = vmatpush1.msra.mxu0 0.0
        %268 = vmatprep.mubr.f32.mxu0 0.0
        %269 = vmatmul.mubr.f32.gmra.mrb[0].mxu0 %v198
        %v270 = vpop.f32.mrb[0].mxu0
        %v271 = vadd.f32 0.0, %v270
        %v272 = vpop.f32.mrb[0].mxu0
        %273 = vdwg.mxu0
        %vm274 = vcmask 261120
        %275 = vst.msk [vmem:[%s161] sm:$0xff] %vm274, %v271
        %s276 = sand.u32 %s90, 1
        %s277 = scalar_lea.sflag [#allocation4], %s276
        %s278 = sand.u32 %s90, 1
        %s279 = smul.addr %s278, 8
        %s280 = scalar_lea.vmem [#allocation3], %s279
        // Predicated region
        $region33: #{tpu_custom_call.1} parent=27 // pred_check
          %p281 = pneg %p100
        $region34: #{tpu_custom_call.1} parent=27 // pred_check_branch
          %283 = sbr.rel (%p281) target = $region36
        $region35: #{tpu_custom_call.1} parent=27 // pred_region
          %s285 = ssub.s32 128, 128
          %286 = vsyncadd %s277, %s285
          %s287 = sadd.s32 %s21, %s20
          %s288 = smul.addr %s287, 128
          %s289 = scalar_lea.hbm %s2, %s288
          %s291 = sshll.u32 %s280, 4
          %s292 = int_to_ptr.vmem [resolvable:$true] %s291
          %294 = dma.vmem_to_hbm [thread:$0]  %s292, 128, %s289, %s277
        $region36: #{tpu_custom_call.1} parent=27 // pred_fallthru
          _
      $region28: #{tpu_custom_call.1} parent=5 // pred_fallthru
        _
      %p295 = scmp.le.s32.totalorder 2, %s11
      // Predicated region
      $region37: #{tpu_custom_call.1} parent=5 // pred_check
        %p296 = pneg %p295
      $region38: #{tpu_custom_call.1} parent=5 // pred_check_branch
        %298 = sbr.rel (%p296) target = $region40
      $region39: #{tpu_custom_call.1} parent=5 // pred_region
        %s299 = ssub.s32 %s11, 2
        // Predicated region
        $region41: #{tpu_custom_call.1} parent=39 // pred_check
          %p300 = pneg %p106
        $region42: #{tpu_custom_call.1} parent=39 // pred_check_branch
          %302 = sbr.rel (%p300) target = $region44
        $region43: #{tpu_custom_call.1} parent=39 // pred_region
          %s303 = sand.u32 %s91, 1
          %s304 = scalar_lea.sflag [#allocation4], %s303
          %s305 = sand.u32 %s91, 1
          %s306 = smul.addr %s305, 8
          %s307 = scalar_lea.vmem [#allocation3], %s306
          %308 = dma.done %s304, 128
        $region44: #{tpu_custom_call.1} parent=39 // pred_fallthru
          _
      $region40: #{tpu_custom_call.1} parent=5 // pred_fallthru
        _
    $region6: #{tpu_custom_call.1} parent=1 // loop_footer
      %s15 = sadd.s32 1, %s11
    $region7: #{tpu_custom_call.1} parent=1 // loop_footer_branch
      %10 = sbr.rel target = $region3
    $region8: #{tpu_custom_call.1} parent=1 // loop_exit
      _
    %309 = vsyncpa [#allocation4], 1
    %s310 = scalar_lea.sflag [#allocation4], 1
    %311 = vsyncpa %s310, 1

</llo_original>
